<compile_context>
chip_gen: v7x
topology: tpu7x:2x2x1
jax: 0.10.0
libtpu: 0.0.40
codegen_flags: <defaults>
</compile_context>

<pallas_src>
import functools
import math

import numpy as np
import jax
import jax.numpy as jnp
from jax.experimental import pallas as pl
from jax.experimental.pallas import tpu as pltpu


def _round_up(x, m):
    return ((x + m - 1) // m) * m


def _stable_sigmoid(x):
    # Single-branch, overflow-safe: both branches use exp(-|x|) in (0, 1].
    z = jnp.exp(-jnp.abs(x))
    return jnp.where(x >= 0.0, 1.0 / (1.0 + z), z / (1.0 + z))


# ------------------------------------------------------------------
# Gather-SpMM kernel: out[r] = sum_{edges (r -> t)} val * E[t]
# Edge metadata in per-row-block padded CSR layout; per-block edge counts and
# column indices are scalar-prefetched into SMEM; the destination segment-sum
# is a one-hot matmul on the MXU.
# ------------------------------------------------------------------

def _spmm_kernel(cnt_sm, t_sm, lh_ref, val_ref, e_ref, o_ref, gath_ref):
    i = pl.program_id(0)
    tm, _ = o_ref.shape
    max_e = gath_ref.shape[0]

    # Zero the gather scratch every step so padded / unused slots contribute 0
    # (safe under megacore "parallel" sharding of the row-block axis).
    gath_ref[...] = jnp.zeros_like(gath_ref)

    n_edges = cnt_sm[i]

    def body(e, carry):
        gath_ref[e, :] = e_ref[t_sm[i, e], :]
        return carry

    jax.lax.fori_loop(0, n_edges, body, 0)

    rows = jax.lax.broadcasted_iota(jnp.int32, (tm, max_e), 0)
    # one-hot weighted scatter matrix; padded slots have val == 0
    w = jnp.where(rows == lh_ref[...], val_ref[...], 0.0)
    o_ref[...] = jnp.dot(w, gath_ref[...], preferred_element_type=jnp.float32)


def spmm_pallas(graph, val_pad, emb):
    """emb: (n, d) float; val_pad: (1, nblk*max_e) f32 in padded-CSR layout."""
    n, d = emb.shape
    tm, nblk = graph['tm'], graph['nblk']
    max_e, n_pad = graph['max_e'], graph['n_pad']
    emb_f = emb.astype(jnp.float32)
    emb_p = emb_f if n_pad == n else jnp.zeros((n_pad, d), jnp.float32).at[:n].set(emb_f)
    out = pl.pallas_call(
        _spmm_kernel,
        out_shape=jax.ShapeDtypeStruct((n_pad, d), jnp.float32),
        grid_spec=pltpu.PrefetchScalarGridSpec(
            num_scalar_prefetch=2,
            grid=(nblk,),
            in_specs=[pl.BlockSpec((1, max_e), lambda i, cnt, tt: (0, i)),   # local dest rows
                      pl.BlockSpec((1, max_e), lambda i, cnt, tt: (0, i)),   # edge values
                      pl.BlockSpec((n_pad, d), lambda i, cnt, tt: (0, 0))],  # emb table, resident
            out_specs=pl.BlockSpec((tm, d), lambda i, cnt, tt: (i, 0)),
            scratch_shapes=[pltpu.VMEM((max_e, d), jnp.float32)]),
        compiler_params=pltpu.CompilerParams(dimension_semantics=("parallel",)),
    )(graph['blk_cnt'], graph['t_pad'], graph['lh_pad'], val_pad, emb_p)
    return out[:n]


# ------------------------------------------------------------------
# DAE recon kernel (feature-major, encoder + decoder.linear1 collapsed):
#   recons^T = B^T @ relu(A^T @ x^T + a^T) + b^T
# ------------------------------------------------------------------

def _dae_kernel(xT_ref, At_ref, aT_ref, Bt_ref, bT_ref, oT_ref):
    h = jnp.dot(At_ref[...], xT_ref[...], preferred_element_type=jnp.float32) + aT_ref[...]
    h = jnp.maximum(h, 0.0)
    oT_ref[...] = jnp.dot(Bt_ref[...], h, preferred_element_type=jnp.float32) + bT_ref[...]


def dae_recons_T(xT, dae_w, *, tcol=512):
    d, m = xT.shape
    tcol = min(tcol, _round_up(m, 128))
    mp = _round_up(m, tcol)
    xTf = xT.astype(jnp.float32)
    xTp = xTf if mp == m else jnp.zeros((d, mp), jnp.float32).at[:, :m].set(xTf)
    out = pl.pallas_call(
        _dae_kernel,
        out_shape=jax.ShapeDtypeStruct((d, mp), jnp.float32),
        grid_spec=pltpu.PrefetchScalarGridSpec(
            num_scalar_prefetch=0,
            grid=(mp // tcol,),
            in_specs=[pl.BlockSpec((d, tcol), lambda i: (0, i))]
                     + [pl.BlockSpec(w.shape, lambda i: (0, 0)) for w in dae_w],
            out_specs=pl.BlockSpec((d, tcol), lambda i: (0, i))),
        compiler_params=pltpu.CompilerParams(dimension_semantics=("parallel",)),
    )(xTp, *dae_w)
    return out[:, :m]


# ------------------------------------------------------------------
# Adaptive-mask label kernel (feature-major): normalize + linear1 + leakyrelu
# + residual + linear2 + sigmoid.  Output is a lane-dense (1, te) slab.
# ------------------------------------------------------------------

def _label_kernel(hT_ref, tT_ref, w1a_ref, w1b_ref, b1_ref, w2_ref, b2_ref, o_ref):
    hT = hT_ref[...]
    tT = tT_ref[...]
    hn = hT * jax.lax.rsqrt(jnp.maximum(jnp.sum(hT * hT, axis=0, keepdims=True), 1e-24))
    tn = tT * jax.lax.rsqrt(jnp.maximum(jnp.sum(tT * tT, axis=0, keepdims=True), 1e-24))
    lat = (jnp.dot(w1a_ref[...], hn, preferred_element_type=jnp.float32)
           + jnp.dot(w1b_ref[...], tn, preferred_element_type=jnp.float32)
           + b1_ref[...])
    lat = jnp.where(lat >= 0.0, lat, 0.2 * lat) + hn + tn          # LeakyReLU(0.2) + residual
    logit = jnp.dot(w2_ref[...], lat, preferred_element_type=jnp.float32) + b2_ref[...]
    o_ref[...] = _stable_sigmoid(logit)


def label_pallas(head_T, tail_T, label_w, *, te):
    d, ep = head_T.shape          # inputs already gathered at padded edge width ep (multiple of te)
    out = pl.pallas_call(
        _label_kernel,
        out_shape=jax.ShapeDtypeStruct((1, ep), jnp.float32),
        grid_spec=pltpu.PrefetchScalarGridSpec(
            num_scalar_prefetch=0,
            grid=(ep // te,),
            in_specs=[pl.BlockSpec((d, te), lambda i: (0, i)),
                      pl.BlockSpec((d, te), lambda i: (0, i))]
                     + [pl.BlockSpec(w.shape, lambda i: (0, 0)) for w in label_w],
            out_specs=pl.BlockSpec((1, te), lambda i: (0, i))),
        compiler_params=pltpu.CompilerParams(dimension_semantics=("parallel",)),
    )(head_T.astype(jnp.float32), tail_T.astype(jnp.float32), *label_w)
    return out[0]


# ------------------------------------------------------------------
# SSL contrastive negatives: per-row sum_j exp(<e1_i, e2_j>/temp), lane-dense output,
# row axis parallel, boundary mask only on the last column block.
# ------------------------------------------------------------------

def _ssl_neg_kernel(e1_ref, e2_ref, o_ref, *, inv_temp, n_real, needs_mask):
    j = pl.program_id(1)

    @pl.when(j == 0)
    def _():
        o_ref[...] = jnp.zeros_like(o_ref)

    # (tc, tr) so the column reduce lands lane-major along the e1 rows.
    simT = jax.lax.dot_general(e2_ref[...], e1_ref[...], (((1,), (1,)), ((), ())),
                               preferred_element_type=jnp.float32) * inv_temp
    if needs_mask:
        last = j == pl.num_programs(1) - 1

        @pl.when(jnp.logical_not(last))
        def _():
            o_ref[...] += jnp.sum(jnp.exp(simT), axis=0, keepdims=True)

        @pl.when(last)
        def _():
            tc, tr = simT.shape
            rows = j * tc + jax.lax.broadcasted_iota(jnp.int32, (tc, tr), 0)
            o_ref[...] += jnp.sum(jnp.where(rows < n_real, jnp.exp(simT), 0.0),
                                  axis=0, keepdims=True)
    else:
        o_ref[...] += jnp.sum(jnp.exp(simT), axis=0, keepdims=True)


def ssl_loss_pallas(e1, e2, temp, *, tile=256):
    n, d = e1.shape
    t = min(tile, _round_up(n, 8))
    npad = _round_up(n, t)
    e1f = e1.astype(jnp.float32)
    e2f = e2.astype(jnp.float32)
    e1p = e1f if npad == n else jnp.zeros((npad, d), jnp.float32).at[:n].set(e1f)
    e2p = e2f if npad == n else jnp.zeros((npad, d), jnp.float32).at[:n].set(e2f)
    needs_mask = npad != n
    kern = functools.partial(_ssl_neg_kernel, inv_temp=1.0 / float(temp),
                             n_real=int(n), needs_mask=needs_mask)
    neg = pl.pallas_call(
        kern,
        out_shape=jax.ShapeDtypeStruct((1, npad), jnp.float32),
        grid_spec=pltpu.PrefetchScalarGridSpec(
            num_scalar_prefetch=0,
            grid=(npad // t, npad // t),
            in_specs=[pl.BlockSpec((t, d), lambda i, j: (i, 0)),    # anchor rows
                      pl.BlockSpec((t, d), lambda i, j: (j, 0))],   # negative rows
            out_specs=pl.BlockSpec((1, t), lambda i, j: (0, i))),
        compiler_params=pltpu.CompilerParams(
            dimension_semantics=("parallel", "arbitrary")),
    )(e1p, e2p)[0, :n]
    # Tiny O(n*d) tail in JAX, using the exact reference InfoNCE formula.
    pos = jnp.exp(jnp.sum(e1f * e2f, axis=1) / temp)
    return jnp.sum(-jnp.log(pos / (neg + 1e-8) + 1e-8)) / n


# ------------------------------------------------------------------
# Fused BPR gates kernel: sigmoid([pos|u] @ Wiu + biu), pos_gate, neg_gate,
# returning gated_neg_r = neg * sigmoid(neg_gate(neg) + pos_gate(pos*gate)).
# ------------------------------------------------------------------

def _gates_kernel(pu_ref, neg_ref, wiu_ref, biu_ref, wp_ref, bp_ref, wn_ref, bn_ref, o_ref):
    d = wp_ref.shape[0]
    K = neg_ref.shape[1]
    pu = pu_ref[...]
    pos = pu[:, :d]
    gate_pos = _stable_sigmoid(
        jnp.dot(pu, wiu_ref[...], preferred_element_type=jnp.float32) + biu_ref[...])
    pos_lin = (jnp.dot(pos * gate_pos, wp_ref[...], preferred_element_type=jnp.float32)
               + bp_ref[...])
    for kk in range(K):                       # K is a small static int
        neg_k = neg_ref[:, kk, :]
        gate_neg = _stable_sigmoid(
            jnp.dot(neg_k, wn_ref[...], preferred_element_type=jnp.float32)
            + bn_ref[...] + pos_lin)
        o_ref[:, kk, :] = neg_k * gate_neg


def gates_pallas(pos_e, u_e, neg_e, gate_w, *, tb=256):
    b, d = pos_e.shape
    K = neg_e.shape[1]
    pu = jnp.concatenate([pos_e, u_e], axis=1).astype(jnp.float32)     # (b, 2d)
    negf = neg_e.astype(jnp.float32)                                   # (b, K, d)
    tb = min(tb, _round_up(b, 8))
    bp = _round_up(b, tb)
    if bp != b:
        pu = jnp.zeros((bp, 2 * d), jnp.float32).at[:b].set(pu)
        negf = jnp.zeros((bp, K, d), jnp.float32).at[:b].set(negf)
    out = pl.pallas_call(
        _gates_kernel,
        out_shape=jax.ShapeDtypeStruct((bp, K, d), jnp.float32),
        grid_spec=pltpu.PrefetchScalarGridSpec(
            num_scalar_prefetch=0,
            grid=(bp // tb,),
            in_specs=[pl.BlockSpec((tb, 2 * d), lambda i: (i, 0)),
                      pl.BlockSpec((tb, K, d), lambda i: (i, 0, 0))]
                     + [pl.BlockSpec(w.shape, lambda i: (0, 0)) for w in gate_w],
            out_specs=pl.BlockSpec((tb, K, d), lambda i: (i, 0, 0))),
        compiler_params=pltpu.CompilerParams(dimension_semantics=("parallel",)),
    )(pu, negf, *gate_w)
    return out[:b]


# ------------------------------------------------------------------
# Parameter init / kernel-layout preparation / graph build (all once, at setup)
# ------------------------------------------------------------------

def xavier_normal(key, shape):
    fan_out, fan_in = shape
    std = math.sqrt(2.0 / (fan_in + fan_out))
    return (std * jax.random.normal(key, shape)).astype(jnp.float32)


def init_params(key, n_users, n_items, d):
    keys = list(jax.random.split(key, 64))
    ki = iter(keys)

    def nrm(shape, std=0.01):
        return (std * jax.random.normal(next(ki), shape)).astype(jnp.float32)

    def dae_params():
        h2 = d // 2
        return {
            'C_w': xavier_normal(next(ki), (h2, d)), 'C_b': nrm((h2,)),
            'P_w': xavier_normal(next(ki), (h2, d)), 'P_b': nrm((h2,)),
            'dec1_w': xavier_normal(next(ki), (d, d)), 'dec1_b': nrm((d,)),
            'dec2_w': xavier_normal(next(ki), (d, d)), 'dec2_b': nrm((d,)),
        }

    return {
        'user_emb': xavier_normal(next(ki), (n_users, d)),
        'item_emb': xavier_normal(next(ki), (n_items, d)),
        'lin1_w': xavier_normal(next(ki), (d, 2 * d)), 'lin1_b': nrm((d,)),
        'lin2_w': xavier_normal(next(ki), (1, d)), 'lin2_b': nrm((1,)),
        'user_gate_w': xavier_normal(next(ki), (d, d)), 'user_gate_b': nrm((d,)),
        'item_gate_w': xavier_normal(next(ki), (d, d)), 'item_gate_b': nrm((d,)),
        'pos_gate_w': xavier_normal(next(ki), (d, d)), 'pos_gate_b': nrm((d,)),
        'neg_gate_w': xavier_normal(next(ki), (d, d)), 'neg_gate_b': nrm((d,)),
        'dae_u': dae_params(),
        'dae_v': dae_params(),
    }


def prepare_kernel_params(params):
    """One-time transposes / reshapes / algebraic fusions into kernel layout."""
    f32 = lambda a: jnp.asarray(a, jnp.float32)

    def dae_pack(p):
        # cat(C(x), P(x)) = x @ Wcp + bcp ; linear1(cat) = x @ (Wcp @ W1^T) + (bcp @ W1^T + b1)
        Wcp = jnp.concatenate([p['C_w'].T, p['P_w'].T], axis=1)            # (d, d)
        bcp = jnp.concatenate([p['C_b'], p['P_b']]).reshape(1, -1)          # (1, d)
        A = Wcp @ p['dec1_w'].T                                             # (d, d)
        a = bcp @ p['dec1_w'].T + p['dec1_b'].reshape(1, -1)                # (1, d)
        # recons = relu(x@A + a) @ W2^T + b2 ; kernel works feature-major (transposed).
        return (f32(A.T), f32(a.T), f32(p['dec2_w']), f32(p['dec2_b'].reshape(-1, 1)))

    d = params['lin2_w'].shape[1]
    label_w = (f32(params['lin1_w'][:, :d]),             # (d, d) acting on normalized head
               f32(params['lin1_w'][:, d:]),              # (d, d) acting on normalized tail
               f32(params['lin1_b'].reshape(-1, 1)),       # (d, 1)
               f32(params['lin2_w'].reshape(1, -1)),       # (1, d)
               f32(params['lin2_b'].reshape(1, 1)))        # (1, 1)
    gates_w = (f32(jnp.concatenate([params['item_gate_w'].T, params['user_gate_w'].T],
                                   axis=0)),               # (2d, d)
               f32((params['item_gate_b'] + params['user_gate_b']).reshape(1, -1)),
               f32(params['pos_gate_w'].T), f32(params['pos_gate_b'].reshape(1, -1)),
               f32(params['neg_gate_w'].T), f32(params['neg_gate_b'].reshape(1, -1)))
    return {'dae_u': dae_pack(params['dae_u']), 'dae_v': dae_pack(params['dae_v']),
            'label': label_w, 'gates': gates_w}


def build_graph(n_users, n_items, *, tm_max=256, te_max=2048):
    """Deterministic bipartite interaction graph.  Returns edge lists, the normalized
    D^{-1/2} A D^{-1/2} values, and the padded-CSR metadata used by the SpMM kernel."""
    pairs = set()
    for u in range(n_users):
        for it in (u % n_items, (u + 3) % n_items, (2 * u + 1) % n_items):
            pairs.add((u, it))
    edges = []
    for (u, it) in sorted(pairs):
        edges.append((u, n_users + it))           # user -> item
        edges.append((n_users + it, u))           # item -> user
    edges.sort()                                  # CSR order: sort by head node
    h = np.asarray([e[0] for e in edges], np.int32)
    t = np.asarray([e[1] for e in edges], np.int32)
    E = len(edges)
    n = n_users + n_items

    deg = np.zeros(n, np.float64)
    np.add.at(deg, h, 1.0)
    d_inv_sqrt = np.where(deg > 0, deg ** -0.5, 0.0)
    g_vals = (d_inv_sqrt[h] * d_inv_sqrt[t]).astype(np.float32)

    # Padded-CSR layout: per row-block of tm destination rows, a fixed max_e edge slab.
    tm = min(tm_max, _round_up(n, 8))
    nblk = -(-n // tm)
    n_pad = nblk * tm
    blk = (h // tm).astype(np.int64)
    cnt = np.bincount(blk, minlength=nblk).astype(np.int32)
    max_e = _round_up(max(int(cnt.max()), 1), 128)
    slot = np.zeros(E, np.int64)
    running = np.zeros(nblk, np.int64)
    for e in range(E):
        b = blk[e]
        slot[e] = running[b]
        running[b] += 1
    pad_slot = (blk * max_e + slot).astype(np.int32)

    t_flat = np.zeros(nblk * max_e, np.int32)
    lh_flat = np.zeros(nblk * max_e, np.int32)
    gv_flat = np.zeros(nblk * max_e, np.float32)
    t_flat[pad_slot] = t
    lh_flat[pad_slot] = h - (blk * tm).astype(np.int32)
    gv_flat[pad_slot] = g_vals

    # Pre-padded gather indices for the label kernel (padded entries sliced off afterwards).
    te = min(te_max, _round_up(E, 128))
    ep = _round_up(E, te)
    h_gath = np.zeros(ep, np.int32)
    t_gath = np.zeros(ep, np.int32)
    h_gath[:E] = h
    t_gath[:E] = t

    return dict(h=jnp.asarray(h), t=jnp.asarray(t), E=E, n=n,
                tm=tm, nblk=nblk, n_pad=n_pad, max_e=max_e,
                blk_cnt=jnp.asarray(cnt),
                t_pad=jnp.asarray(t_flat.reshape(nblk, max_e)),
                lh_pad=jnp.asarray(lh_flat.reshape(1, nblk * max_e)),
                g_val_pad=jnp.asarray(gv_flat.reshape(1, nblk * max_e)),
                pad_slot=jnp.asarray(pad_slot),
                h_gath=jnp.asarray(h_gath), t_gath=jnp.asarray(t_gath),
                te=te, ep=ep)


def l2norm(x, eps=1e-12):
    nrm = jnp.sqrt(jnp.sum(x * x, axis=1, keepdims=True))
    return x / jnp.maximum(nrm, eps)


# ------------------------------------------------------------------
# Forward pass
# ------------------------------------------------------------------

def inference(params, kparams, graph, cfg):
    n_users, n_items = cfg['n_users'], cfg['n_items']
    n = n_users + n_items
    h, E = graph['h'], graph['E']

    all_emb = [jnp.concatenate([params['user_emb'], params['item_emb']], axis=0)]
    gnn_list, int_list, iaa_list = [], [], []
    cor = jnp.float32(0.0)

    for i in range(cfg['n_layers']):
        emb = all_emb[i]
        gnn = spmm_pallas(graph, graph['g_val_pad'], emb)                   # spmm(G, E)

        u_embT = emb[:n_users].T
        i_embT = emb[n_users:].T
        zrT = dae_recons_T(u_embT, kparams['dae_u'])                        # (d, n_users)
        zirT = dae_recons_T(i_embT, kparams['dae_v'])                       # (d, n_items)
        int_T = jnp.concatenate([zrT + u_embT, zirT + i_embT], axis=1)      # (d, n)
        cor = cor + jnp.mean((zrT - u_embT) ** 2) + jnp.mean((zirT - i_embT) ** 2)

        # Adaptive mask values over the edge list (column gathers stay in JAX).
        head_T = int_T[:, graph['h_gath']]
        tail_T = int_T[:, graph['t_gath']]
        alpha = label_pallas(head_T, tail_T, kparams['label'], te=graph['te'])[:E]

        row_sum = jnp.zeros((n,), jnp.float32).at[h].add(alpha)
        d_inv = jnp.where(row_sum > 0, 1.0 / row_sum, 0.0)                  # pow(-1).nan_to_num
        g_vals = d_inv[h] * alpha
        val_pad = jnp.zeros((1, graph['nblk'] * graph['max_e']), jnp.float32
                            ).at[0, graph['pad_slot']].set(g_vals)
        iaa = spmm_pallas(graph, val_pad, emb)                              # spmm(G_inten, E)

        gnn_list.append(gnn)
        int_list.append(int_T.T)
        iaa_list.append(iaa)
        all_emb.append(gnn + iaa + emb)

    summed = sum(all_emb)                                                   # stack + sum layers
    return gnn_list, int_list, iaa_list, cor, summed[:n_users], summed[n_users:]


def negative_sampling(ua, ia, users, neg_candidates):
    s_e = ua[users]                                    # (B, D)
    n_e = ia[neg_candidates]                           # (B, n_negs, D)
    scores = jnp.sum(s_e[:, None, :] * n_e, axis=-1)   # (B, n_negs)
    idx = jnp.argmax(scores, axis=1)
    neg_item = jnp.take_along_axis(neg_candidates, idx[:, None], axis=1)[:, 0]
    return ia[neg_item]


def _stable_log1p_sum_exp(x):
    """log(1 + sum_k exp(x_k)) per row, overflow-safe (== original formula)."""
    m = jnp.maximum(jnp.max(x, axis=1), 0.0)
    return m + jnp.log(jnp.exp(-m) + jnp.sum(jnp.exp(x - m[:, None]), axis=1))


def cal_bpr_loss(kparams, cfg, u_e, pos_e, neg_e):
    pos_scores = jnp.sum(u_e * pos_e, axis=1)                               # (B,)
    neg_scores = jnp.sum(u_e[:, None, :] * neg_e, axis=-1)                  # (B, K)
    mf = jnp.mean(_stable_log1p_sum_exp(neg_scores - pos_scores[:, None]))
    if cfg['ns'] == 'ns' and cfg['gamma'] > 0.0:
        gated_neg_r = gates_pallas(pos_e, u_e, neg_e, kparams['gates'])     # (B, K, D)
        gated_neg_ir = neg_e - gated_neg_r
        s_r = jnp.sum(u_e[:, None, :] * gated_neg_r, axis=-1)
        s_ir = jnp.sum(u_e[:, None, :] * gated_neg_ir, axis=-1)
        mf = mf + cfg['gamma'] * jnp.mean(_stable_log1p_sum_exp(s_r - s_ir))
    return mf


def cal_ssl_loss(cfg, users, items, gnn_list, int_list, iaa_list):
    nu = cfg['n_users']
    temp = cfg['temp']
    cl = jnp.float32(0.0)
    for i in range(len(gnn_list)):
        u_gnn = l2norm(gnn_list[i][:nu][users]); i_gnn = l2norm(gnn_list[i][nu:][items])
        u_int = l2norm(int_list[i][:nu][users]); i_int = l2norm(int_list[i][nu:][items])
        u_iaa = l2norm(iaa_list[i][:nu][users]); i_iaa = l2norm(iaa_list[i][nu:][items])
        cl = cl + ssl_loss_pallas(u_gnn, u_int, temp)
        cl = cl + ssl_loss_pallas(u_gnn, u_iaa, temp)
        cl = cl + ssl_loss_pallas(i_gnn, i_int, temp)
        cl = cl + ssl_loss_pallas(i_gnn, i_iaa, temp)
    return cl


def adgcl_forward(params, kparams, graph, cfg, users, pos_items, neg_items,
                  uniq_users, uniq_items):
    gnn_list, int_list, iaa_list, cor, ua, ia = inference(params, kparams, graph, cfg)

    k, n_negs = cfg['K'], cfg['n_negs']
    negs = []
    for kk in range(k):
        negs.append(negative_sampling(ua, ia, users,
                                      neg_items[:, kk * n_negs:(kk + 1) * n_negs]))
    neg_embeddings = jnp.stack(negs, axis=1)                                # (B, K, D)

    u_e = ua[users]
    pos_e = ia[pos_items]
    mf_loss = cal_bpr_loss(kparams, cfg, u_e, pos_e, neg_embeddings)

    u_pre = params['user_emb'][users]
    pos_pre = params['item_emb'][pos_items]
    neg_pre = params['item_emb'][neg_items]
    emb_loss = cfg['emb_reg'] * (jnp.sum(u_pre ** 2) + jnp.sum(pos_pre ** 2)
                                 + jnp.sum(neg_pre ** 2))
    cen_loss = cfg['cor_reg'] * cor
    cl_loss = cfg['ssl_reg'] * cal_ssl_loss(cfg, uniq_users, uniq_items,
                                            gnn_list, int_list, iaa_list)
    return mf_loss, emb_loss, cen_loss, cl_loss


# ------------------------------------------------------------------
# Main
# ------------------------------------------------------------------

if __name__ == "__main__":
    n_users, n_items, emb_dim = 8, 12, 16
    cfg = dict(n_users=n_users, n_items=n_items, emb_dim=emb_dim, n_layers=2,
               temp=0.2, batch_size=4, emb_reg=1e-5, cor_reg=1e-3, ssl_reg=1e-4,
               n_negs=4, ns='ns', K=2, gamma=0.5)

    key = jax.random.PRNGKey(0)
    pkey, ukey, ikey, nkey = jax.random.split(key, 4)
    params = init_params(pkey, n_users, n_items, emb_dim)
    kparams = prepare_kernel_params(params)
    graph = build_graph(n_users, n_items)

    users = jax.random.randint(ukey, (cfg['batch_size'],), 0, n_users, dtype=jnp.int32)
    pos_items = jax.random.randint(ikey, (cfg['batch_size'],), 0, n_items, dtype=jnp.int32)
    neg_items = jax.random.randint(nkey, (cfg['batch_size'], cfg['K'] * cfg['n_negs']),
                                   0, n_items, dtype=jnp.int32)

    # torch.unique (dynamic shape) computed host-side before launching the kernels.
    uniq_users = jnp.asarray(np.unique(np.asarray(users)), dtype=jnp.int32)
    uniq_items = jnp.asarray(np.unique(np.asarray(pos_items)), dtype=jnp.int32)

    losses = adgcl_forward(params, kparams, graph, cfg, users, pos_items, neg_items,
                           uniq_users, uniq_items)
    losses = jax.block_until_ready(losses)
    mf_loss, emb_loss, cen_loss, cl_loss = [float(x) for x in losses]
    assert all(np.isfinite(v) for v in (mf_loss, emb_loss, cen_loss, cl_loss))
    print("KERNEL_OK")
</pallas_src>

<mosaic_0001>
module attributes {stable_mosaic.version = 11 : i64} {
  func.func @_spmm_kernel(%arg0: i32, %arg1: memref<1xi32, #tpu.memory_space<smem>>, %arg2: memref<1x128xi32, #tpu.memory_space<smem>>, %arg3: memref<1x128xi32, #tpu.memory_space<vmem>>, %arg4: memref<1x128xf32, #tpu.memory_space<vmem>>, %arg5: memref<24x16xf32, #tpu.memory_space<vmem>>, %arg6: memref<24x16xf32, #tpu.memory_space<vmem>>, %arg7: memref<128x16xf32, #tpu.memory_space<vmem>>) attributes {dimension_semantics = [#tpu.dimension_semantics<parallel>], iteration_bounds = array<i64: 1>, scalar_prefetch = 2 : i64, scratch_operands = 1 : i64, tpu.core_type = #tpu.core_type<tc>, window_params = [{transform_indices = @transform_0, window_bounds = array<i64: 1, 128>}, {transform_indices = @transform_1, window_bounds = array<i64: 1, 128>}, {pipeline_mode = #tpu.pipeline_mode<synchronous>, transform_indices = @transform_2, window_bounds = array<i64: 24, 16>}, {transform_indices = @transform_3, window_bounds = array<i64: 24, 16>}]} {
    %cst = arith.constant 0.000000e+00 : f32
    %0 = vector.broadcast %cst : f32 to vector<128x16xf32>
    %c0 = arith.constant 0 : index
    %c0_0 = arith.constant 0 : index
    %1 = vector.load %arg7[%c0, %c0_0] : memref<128x16xf32, #tpu.memory_space<vmem>>, vector<128x16xf32>
    tpu.vector_store %arg7[%c0, %c0_0], %0 {strides = array<i32>} : memref<128x16xf32, #tpu.memory_space<vmem>>, vector<128x16xf32>,
    %2 = arith.index_cast %arg0 : i32 to index
    %3 = memref.load %arg1[%2] : memref<1xi32, #tpu.memory_space<smem>>
    %c0_i32 = arith.constant 0 : i32
    %c0_i32_1 = arith.constant 0 : i32
    %4 = arith.subi %3, %c0_i32_1 : i32
    %5 = arith.addi %c0_i32_1, %4 : i32
    %c1_i32 = arith.constant 1 : i32
    scf.for %arg8 = %c0_i32_1 to %5 step %c1_i32  : i32 {
      %18 = arith.index_cast %arg0 : i32 to index
      %19 = arith.index_cast %arg8 : i32 to index
      %20 = memref.load %arg2[%18, %19] : memref<1x128xi32, #tpu.memory_space<smem>>
      %21 = arith.index_cast %20 : i32 to index
      %c0_12 = arith.constant 0 : index
      %22 = vector.load %arg5[%21, %c0_12] : memref<24x16xf32, #tpu.memory_space<vmem>>, vector<1x16xf32>
      %23 = vector.shape_cast %22 : vector<1x16xf32> to vector<16xf32>
      %24 = arith.index_cast %arg8 : i32 to index
      %c0_13 = arith.constant 0 : index
      %25 = vector.load %arg7[%24, %c0_13] : memref<128x16xf32, #tpu.memory_space<vmem>>, vector<1x16xf32>
      %26 = vector.shape_cast %25 : vector<1x16xf32> to vector<16xf32>
      %27 = vector.shape_cast %23 : vector<16xf32> to vector<1x16xf32>
      tpu.vector_store %arg7[%24, %c0_13], %27 {strides = array<i32>} : memref<128x16xf32, #tpu.memory_space<vmem>>, vector<1x16xf32>,
    }
    %6 = tpu.iota {dimensions = array<i32: 0>} : vector<24x128xi32>
    %c0_2 = arith.constant 0 : index
    %c0_3 = arith.constant 0 : index
    %7 = vector.load %arg3[%c0_2, %c0_3] : memref<1x128xi32, #tpu.memory_space<vmem>>, vector<1x128xi32>
    %8 = vector.broadcast %7 : vector<1x128xi32> to vector<24x128xi32>
    %9 = arith.cmpi eq, %6, %8 : vector<24x128xi32>
    %c0_4 = arith.constant 0 : index
    %c0_5 = arith.constant 0 : index
    %10 = vector.load %arg4[%c0_4, %c0_5] : memref<1x128xf32, #tpu.memory_space<vmem>>, vector<1x128xf32>
    %cst_6 = arith.constant 0.000000e+00 : f32
    %11 = vector.shape_cast %10 : vector<1x128xf32> to vector<1x128xf32>
    %12 = vector.broadcast %11 : vector<1x128xf32> to vector<24x128xf32>
    %13 = vector.broadcast %cst_6 : f32 to vector<24x128xf32>
    %14 = arith.select %9, %12, %13 : vector<24x128xi1>, vector<24x128xf32>
    %c0_7 = arith.constant 0 : index
    %c0_8 = arith.constant 0 : index
    %15 = vector.load %arg7[%c0_7, %c0_8] : memref<128x16xf32, #tpu.memory_space<vmem>>, vector<128x16xf32>
    %cst_9 = arith.constant dense<0.000000e+00> : vector<24x16xf32>
    %16 = tpu.matmul %14, %15, %cst_9 {dimension_numbers = #tpu.dot_dimension_numbers<[1], [0], [0], [1], [0, 0, 1, 1], [], []>} : vector<24x128xf32>, vector<128x16xf32>, vector<24x16xf32> -> vector<24x16xf32>
    %c0_10 = arith.constant 0 : index
    %c0_11 = arith.constant 0 : index
    %17 = vector.load %arg6[%c0_10, %c0_11] : memref<24x16xf32, #tpu.memory_space<vmem>>, vector<24x16xf32>
    tpu.vector_store %arg6[%c0_10, %c0_11], %16 {strides = array<i32>} : memref<24x16xf32, #tpu.memory_space<vmem>>, vector<24x16xf32>,
    return
  }
  func.func @transform_0(%arg0: i32, %arg1: memref<1xi32, #tpu.memory_space<smem>>, %arg2: memref<1x128xi32, #tpu.memory_space<smem>>) -> (i32, i32) {
    %c0_i32 = arith.constant 0 : i32
    %c0_i32_0 = arith.constant 0 : i32
    return %c0_i32, %arg0 : i32, i32
  }
  func.func @transform_1(%arg0: i32, %arg1: memref<1xi32, #tpu.memory_space<smem>>, %arg2: memref<1x128xi32, #tpu.memory_space<smem>>) -> (i32, i32) {
    %c0_i32 = arith.constant 0 : i32
    %c0_i32_0 = arith.constant 0 : i32
    return %c0_i32, %arg0 : i32, i32
  }
  func.func @transform_2(%arg0: i32, %arg1: memref<1xi32, #tpu.memory_space<smem>>, %arg2: memref<1x128xi32, #tpu.memory_space<smem>>) -> (i32, i32) {
    %c0_i32 = arith.constant 0 : i32
    %c0_i32_0 = arith.constant 0 : i32
    %c0_i32_1 = arith.constant 0 : i32
    return %c0_i32, %c0_i32_0 : i32, i32
  }
  func.func @transform_3(%arg0: i32, %arg1: memref<1xi32, #tpu.memory_space<smem>>, %arg2: memref<1x128xi32, #tpu.memory_space<smem>>) -> (i32, i32) {
    %c0_i32 = arith.constant 0 : i32
    %c0_i32_0 = arith.constant 0 : i32
    return %arg0, %c0_i32 : i32, i32
  }
}

</mosaic_0001>

<llo_original>
// kernel: tpu_custom_call.1
$region0: #{tpu_custom_call.1}
  #allocation0 [shape = 'u32[]', space=smem, size = 0x4, offset = 0x4, fixed_abs, tag = 'smem constant byte address 0x4 - core index']
  #allocation1 [shape = 'u32[144,128]{1,0:T(1,128)}', space=vmem, size = 0x12000, scoped, tag = 'internal scratch']
  #allocation2 [shape = 'f32[128,16]{1,0:T(8,128)}', space=vmem, size = 0x10000, scoped, tag = 'scratch operand']
  #allocation3 [shape = 's32[1]{0}', space=sflag, size = 0x4, scoped, tag = 'scoped memory for tpu_custom_call.1']
  #allocation4 [shape = 's32[1]{0:T(128)S(6)}', space=smem, size = 0x200, scoped, tag = 'prefetched SMEM operand 0']
  #allocation5 [shape = 'u8[512]{0}', space=smem, size = 0x200, scoped, tag = 'prefetched SMEM operand 1']
  %s0 = inlined_call_operand.<no memory space> [shape: s32[1], index: 0, kind: input, shape index: {}]
  %s1 = inlined_call_operand.vmem [shape: s32[1,128], index: 1, kind: input, shape index: {}]
  %s2 = inlined_call_operand.vmem [shape: s32[1,128], index: 2, kind: input, shape index: {}]
  %s3 = inlined_call_operand.vmem [shape: f32[1,128], index: 3, kind: input, shape index: {}]
  %s4 = inlined_call_operand.vmem [shape: f32[24,16], index: 4, kind: input, shape index: {}]
  %s5 = inlined_call_operand.vmem [shape: f32[24,16], index: 5, kind: output, shape index: {}]
  %s6 = sld [smem:[#allocation0]]
  $region29: #{tpu_custom_call.1} parent=0
    _
  %s8 = ssub.s32 1, %s6
  %s9 = scalar_select 0, %s8, %s6
  %10 = sst [smem:[#allocation4]] %s0
  %s11 = sshll.u32 %s1, 4
  %s12 = int_to_ptr.vmem [resolvable:$true] %s11
  %14 = dma.vmem_to_smem %s12, 16, [#allocation5], [#allocation3]
  %15 = dma.done [#allocation3], 16
  %16 = sfence
  // Predicated region
  $region2: #{tpu_custom_call.1} parent=0 // pred_check
    _
  $region3: #{tpu_custom_call.1} parent=0 // pred_check_branch
    %18 = sbr.rel (0) target = $region5
  $region4: #{tpu_custom_call.1} parent=0 // pred_region
    _
  $region5: #{tpu_custom_call.1} parent=0 // pred_fallthru
    _
  // Predicated region
  $region6: #{tpu_custom_call.1} parent=0 // pred_check
    _
  $region7: #{tpu_custom_call.1} parent=0 // pred_check_branch
    %20 = sbr.rel (0) target = $region9
  $region8: #{tpu_custom_call.1} parent=0 // pred_region
    _
  $region9: #{tpu_custom_call.1} parent=0 // pred_fallthru
    _
  // Predicated region
  $region10: #{tpu_custom_call.1} parent=0 // pred_check
    _
  $region11: #{tpu_custom_call.1} parent=0 // pred_check_branch
    %22 = sbr.rel (0) target = $region13
  $region12: #{tpu_custom_call.1} parent=0 // pred_region
    _
  $region13: #{tpu_custom_call.1} parent=0 // pred_fallthru
    _
  %vm23 = vcmask 130048
  %24 = vst.msk [vmem:[#allocation2] sm:$0xff] %vm23, 0.0
  %25 = vst.msk [vmem:[#allocation2 + $0x8] sm:$0xff] %vm23, 0.0
  %26 = vst.msk [vmem:[#allocation2 + $0x10] sm:$0xff] %vm23, 0.0
  %27 = vst.msk [vmem:[#allocation2 + $0x18] sm:$0xff] %vm23, 0.0
  %28 = vst.msk [vmem:[#allocation2 + $0x20] sm:$0xff] %vm23, 0.0
  %29 = vst.msk [vmem:[#allocation2 + $0x28] sm:$0xff] %vm23, 0.0
  %30 = vst.msk [vmem:[#allocation2 + $0x30] sm:$0xff] %vm23, 0.0
  %31 = vst.msk [vmem:[#allocation2 + $0x38] sm:$0xff] %vm23, 0.0
  %32 = vst.msk [vmem:[#allocation2 + $0x40] sm:$0xff] %vm23, 0.0
  %33 = vst.msk [vmem:[#allocation2 + $0x48] sm:$0xff] %vm23, 0.0
  %34 = vst.msk [vmem:[#allocation2 + $0x50] sm:$0xff] %vm23, 0.0
  %35 = vst.msk [vmem:[#allocation2 + $0x58] sm:$0xff] %vm23, 0.0
  %36 = vst.msk [vmem:[#allocation2 + $0x60] sm:$0xff] %vm23, 0.0
  %37 = vst.msk [vmem:[#allocation2 + $0x68] sm:$0xff] %vm23, 0.0
  %38 = vst.msk [vmem:[#allocation2 + $0x70] sm:$0xff] %vm23, 0.0
  %39 = vst.msk [vmem:[#allocation2 + $0x78] sm:$0xff] %vm23, 0.0
  %s40 = sld [smem:[#allocation4]]
  // While loop
  $region14: #{tpu_custom_call.1} parent=0 // loop_pre_header
    _
  $region15: #{tpu_custom_call.1} parent=0 // loop_header
    %s42 = sphi 0, %s44
    %p43 = scmp.ge.s32.totalorder %s42, %s40
  $region16: #{tpu_custom_call.1} parent=0 // loop_header_branch
    %46 = sbr.rel (%p43) target = $region20
  $region17: #{tpu_custom_call.1} parent=0 // loop_body
    %s47 = sshra.s32 %s42, 7
    %s48 = sand.u32 %s42, 127
    %s49 = sadd.s32 %s47, 0
    %s50 = smul.u32 %s49, 128
    %s51 = sshra.s32 %s42, 7
    %s52 = sand.u32 %s42, 127
    %s53 = sadd.s32 %s50, %s52
    %s54 = sld [smem:[#allocation5 + %s53]]
    %s55 = scalar_lea.vmem %s4, %s54
    %v56 = vld [vmem:[%s55] sm:$0x1]
    %s57 = scalar_lea.vmem [#allocation2], %s42
    %vm58 = vcmask 122880
    %59 = vst.msk [vmem:[%s57] sm:$0x1] %vm58, %v56
  $region18: #{tpu_custom_call.1} parent=0 // loop_footer
    %s44 = sadd.s32 %s42, 1
  $region19: #{tpu_custom_call.1} parent=0 // loop_footer_branch
    %41 = sbr.rel target = $region15
  $region20: #{tpu_custom_call.1} parent=0 // loop_exit
    _
  %v60 = vlaneseq
  %v61 = vshrl.u32 %v60, 7
  %v62 = vadd.s32 %v61, 8
  %v63 = vadd.s32 %v61, 16
  %v64 = vld [vmem:[%s2] sm:$0x1]
  %v65 = vlaneseq
  %v66 = vshrl.u32 %v65, 7
  %v67 = vsub.s32 0, %v66
  %v68 = vrot.slane %v64, %v67
  %vm69 = vcmp.eq.s32.totalorder %v61, %v68
  %vm70 = vcmp.eq.s32.totalorder %v62, %v68
  %vm71 = vcmp.eq.s32.totalorder %v63, %v68
  %v72 = vld [vmem:[%s3] sm:$0x1]
  %v74 = vlaneseq
  %v75 = vshrl.u32 %v74, 7
  %v76 = vsub.s32 0, %v75
  %v77 = vrot.slane %v72, %v76
  %v79 = vsel %vm69, %v77, 0.0
  %v80 = vsel %vm70, %v77, 0.0
  %v81 = vsel %vm71, %v77, 0.0
  %v82 = vld [vmem:[#allocation2] sm:$0xff]
  %v83 = vld [vmem:[#allocation2 + $0x8] sm:$0xff]
  %v84 = vld [vmem:[#allocation2 + $0x10] sm:$0xff]
  %v85 = vld [vmem:[#allocation2 + $0x18] sm:$0xff]
  %v86 = vld [vmem:[#allocation2 + $0x20] sm:$0xff]
  %v87 = vld [vmem:[#allocation2 + $0x28] sm:$0xff]
  %v88 = vld [vmem:[#allocation2 + $0x30] sm:$0xff]
  %v89 = vld [vmem:[#allocation2 + $0x38] sm:$0xff]
  %v90 = vld [vmem:[#allocation2 + $0x40] sm:$0xff]
  %v91 = vld [vmem:[#allocation2 + $0x48] sm:$0xff]
  %v92 = vld [vmem:[#allocation2 + $0x50] sm:$0xff]
  %v93 = vld [vmem:[#allocation2 + $0x58] sm:$0xff]
  %v94 = vld [vmem:[#allocation2 + $0x60] sm:$0xff]
  %v95 = vld [vmem:[#allocation2 + $0x68] sm:$0xff]
  %v96 = vld [vmem:[#allocation2 + $0x70] sm:$0xff]
  %v97 = vld [vmem:[#allocation2 + $0x78] sm:$0xff]
  %98 = vmatprep.subr.mxu0 0.0
  %99 = vmatpush1.msra.mxu0 %v82
  %100 = vmatprep.subr.mxu0 0.0
  %101 = vmatpush1.msra.mxu0 %v83
  %102 = vmatprep.subr.mxu0 0.0
  %103 = vmatpush1.msra.mxu0 %v84
  %104 = vmatprep.subr.mxu0 0.0
  %105 = vmatpush1.msra.mxu0 %v85
  %106 = vmatprep.subr.mxu0 0.0
  %107 = vmatpush1.msra.mxu0 %v86
  %108 = vmatprep.subr.mxu0 0.0
  %109 = vmatpush1.msra.mxu0 %v87
  %110 = vmatprep.subr.mxu0 0.0
  %111 = vmatpush1.msra.mxu0 %v88
  %112 = vmatprep.subr.mxu0 0.0
  %113 = vmatpush1.msra.mxu0 %v89
  %114 = vmatprep.subr.mxu0 0.0
  %115 = vmatpush1.msra.mxu0 %v90
  %116 = vmatprep.subr.mxu0 0.0
  %117 = vmatpush1.msra.mxu0 %v91
  %118 = vmatprep.subr.mxu0 0.0
  %119 = vmatpush1.msra.mxu0 %v92
  %120 = vmatprep.subr.mxu0 0.0
  %121 = vmatpush1.msra.mxu0 %v93
  %122 = vmatprep.subr.mxu0 0.0
  %123 = vmatpush1.msra.mxu0 %v94
  %124 = vmatprep.subr.mxu0 0.0
  %125 = vmatpush1.msra.mxu0 %v95
  %126 = vmatprep.subr.mxu0 0.0
  %127 = vmatpush1.msra.mxu0 %v96
  %128 = vmatprep.subr.mxu0 0.0
  %129 = vmatpush1.msra.mxu0 %v97
  %130 = vmatprep.subr.mxu0 0.0
  %131 = vmatpush1.msra.mxu0 0.0
  %132 = vmatprep.subr.mxu0 0.0
  %133 = vmatpush1.msra.mxu0 0.0
  %134 = vmatprep.subr.mxu0 0.0
  %135 = vmatpush1.msra.mxu0 0.0
  %136 = vmatprep.subr.mxu0 0.0
  %137 = vmatpush1.msra.mxu0 0.0
  %138 = vmatprep.subr.mxu0 0.0
  %139 = vmatpush1.msra.mxu0 0.0
  %140 = vmatprep.subr.mxu0 0.0
  %141 = vmatpush1.msra.mxu0 0.0
  %142 = vmatprep.subr.mxu0 0.0
  %143 = vmatpush1.msra.mxu0 0.0
  %144 = vmatprep.subr.mxu0 0.0
  %145 = vmatpush1.msra.mxu0 0.0
  %146 = vmatprep.subr.mxu0 0.0
  %147 = vmatpush1.msra.mxu0 0.0
  %148 = vmatprep.subr.mxu0 0.0
  %149 = vmatpush1.msra.mxu0 0.0
  %150 = vmatprep.subr.mxu0 0.0
  %151 = vmatpush1.msra.mxu0 0.0
  %152 = vmatprep.subr.mxu0 0.0
  %153 = vmatpush1.msra.mxu0 0.0
  %154 = vmatprep.subr.mxu0 0.0
  %155 = vmatpush1.msra.mxu0 0.0
  %156 = vmatprep.subr.mxu0 0.0
  %157 = vmatpush1.msra.mxu0 0.0
  %158 = vmatprep.subr.mxu0 0.0
  %159 = vmatpush1.msra.mxu0 0.0
  %160 = vmatprep.subr.mxu0 0.0
  %161 = vmatpush1.msra.mxu0 0.0
  %162 = vmatprep.mubr.f32.mxu0 0.0
  %163 = vmatmul.mubr.f32.gmra.mrb[0].mxu0 %v79
  %v164 = vpop.f32.mrb[0].mxu0
  %v165 = vadd.f32 0.0, %v164
  %v166 = vpop.f32.mrb[0].mxu0
  %167 = vmatprep.mubr.f32.mxu0 0.0
  %168 = vmatmul.mubr.f32.gmra.mrb[0].mxu0 %v80
  %v169 = vpop.f32.mrb[0].mxu0
  %v170 = vadd.f32 0.0, %v169
  %v171 = vpop.f32.mrb[0].mxu0
  %172 = vmatprep.mubr.f32.mxu0 0.0
  %173 = vmatmul.mubr.f32.gmra.mrb[0].mxu0 %v81
  %v174 = vpop.f32.mrb[0].mxu0
  %v175 = vadd.f32 0.0, %v174
  %v176 = vpop.f32.mrb[0].mxu0
  %177 = vdwg.mxu0
  %178 = vst.msk [vmem:[%s5] sm:$0xff] %vm23, %v165
  %179 = vst.msk [vmem:[%s5 + $0x8] sm:$0xff] %vm23, %v170
  %180 = vst.msk [vmem:[%s5 + $0x10] sm:$0xff] %vm23, %v175
  // Predicated region
  $region21: #{tpu_custom_call.1} parent=0 // pred_check
    _
  $region22: #{tpu_custom_call.1} parent=0 // pred_check_branch
    %182 = sbr.rel (0) target = $region24
  $region23: #{tpu_custom_call.1} parent=0 // pred_region
    _
  $region24: #{tpu_custom_call.1} parent=0 // pred_fallthru
    _
  // Predicated region
  $region25: #{tpu_custom_call.1} parent=0 // pred_check
    _
  $region26: #{tpu_custom_call.1} parent=0 // pred_check_branch
    %184 = sbr.rel (0) target = $region28
  $region27: #{tpu_custom_call.1} parent=0 // pred_region
    _
  $region28: #{tpu_custom_call.1} parent=0 // pred_fallthru
    _

</llo_original>
